<compile_context>
chip_gen: v5e
topology: v5e:2x2
jax: 0.10.0
libtpu: 0.0.40
codegen_flags: <defaults>
</compile_context>

<pallas_src>
import jax
import jax.numpy as jnp
import numpy as np
from jax.experimental import pallas as pl
from jax.experimental.pallas import tpu as pltpu


def _round_up(x, m):
    return ((x + m - 1) // m) * m


def _choose_tile_b(B, D, tile_b):
    """Pick a batch-tile size: multiple of 8, VMEM-footprint-aware, >=2 grid steps."""
    # Double-buffered footprint ~ 2 bufs * (in + out) * tb * D * 4 B  <= ~8 MiB.
    budget = 8 * 1024 * 1024
    cap = max(8, (budget // (16 * D)) // 8 * 8)
    tb = max(8, (min(tile_b, cap) // 8) * 8)
    if B <= 8:
        return B                              # full-dim block (allowed even if not %8)
    tb = min(tb, (B // 8) * 8)                # block <= array; ragged tail via cdiv grid
    # Guarantee at least 2 grid steps (v7x has 2 TensorCores; also enables pipelining).
    if pl.cdiv(B, tb) < 2:
        tb = min(max(8, _round_up(pl.cdiv(B, 2), 8)), (B // 8) * 8)
        tb = max(tb, 8)
    return tb


def _gk_kernel(params_ref, u_ref, z_ref):
    # params_ref: (5, D) packed [a; b; 0.8*b; 0.5*g; k] -- grid-resident (one DMA)
    # u_ref / z_ref: (tb, D) batch tile (lane-dense when D % 128 == 0)
    p = params_ref[...]                       # (5, D)
    a      = p[0:1, :]                        # (1, D) -> broadcasts along sublanes
    b      = p[1:2, :]
    b8     = p[2:3, :]                        # 0.8 * b (folded on host)
    g_half = p[3:4, :]                        # 0.5 * g (folded on host)
    k      = p[4:5, :]

    u = u_ref[...].astype(jnp.float32)        # compute in f32 regardless of I/O dtype

    t = jnp.tanh(g_half * u)                  # EUP: (1-e^-gu)/(1+e^-gu) == tanh(gu/2)
    kurt = jnp.exp(k * jnp.log1p(u * u))      # EUP x2: (1+u^2)^k, base >= 1

    z_ref[...] = (a + (b + b8 * t) * kurt * u).astype(z_ref.dtype)


def gk_forward(u, a, b, g, k, *, tile_b=2048, out_dtype=None):
    """Forward of MultivariateGKDistribution.

    u: (B, D) samples (f32 or bf16); a, b, g, k: (D,) per-dimension parameters.
    Returns z with dtype `out_dtype` (defaults to u.dtype).
    """
    B, D = u.shape
    out_dtype = u.dtype if out_dtype is None else out_dtype
    # NOTE: keep D a multiple of 128 in production for unmasked lane-dense stores.

    params = jnp.stack(
        [
            a.reshape(D),
            b.reshape(D),
            0.8 * b.reshape(D),
            0.5 * g.reshape(D),
            k.reshape(D),
        ],
        axis=0,
    ).astype(jnp.float32)                     # single (5, D) grid-resident VMEM tile

    tb = _choose_tile_b(B, D, tile_b)
    grid = (pl.cdiv(B, tb),)                  # ragged last block handled by Pallas

    io_bytes = (jnp.dtype(u.dtype).itemsize + jnp.dtype(out_dtype).itemsize) * B * D
    cost = pl.CostEstimate(
        flops=10 * B * D,
        transcendentals=3 * B * D,
        bytes_accessed=io_bytes + 5 * D * 4,
    )

    z = pl.pallas_call(
        _gk_kernel,
        out_shape=jax.ShapeDtypeStruct((B, D), out_dtype),
        grid_spec=pltpu.PrefetchScalarGridSpec(
            num_scalar_prefetch=0,
            grid=grid,
            in_specs=[
                pl.BlockSpec((5, D), lambda i: (0, 0)),    # packed params, resident
                pl.BlockSpec((tb, D), lambda i: (i, 0)),   # batch tile of u
            ],
            out_specs=pl.BlockSpec((tb, D), lambda i: (i, 0)),
        ),
        compiler_params=pltpu.CompilerParams(
            dimension_semantics=("parallel",),
            vmem_limit_bytes=32 * 1024 * 1024,
        ),
        cost_estimate=cost,
    )(params, u)

    return z


def _reference_forward(u, a, b, g, k):
    """Pure-JAX mirror of the PyTorch module's literal forward (for validation)."""
    return (a + b * (1 + 0.8 * (1 - jnp.exp(-g * u)) / (1 + jnp.exp(-g * u)))
            * (1 + u ** 2) ** k * u)


if __name__ == "__main__":
    key = jax.random.PRNGKey(0)
    k_u, k_a, k_b, k_g, k_k = jax.random.split(key, 5)

    B, D = 16, 128   # small, lane-dense example (D multiple of 128 -> unmasked stores)

    u = jax.random.normal(k_u, (B, D), jnp.float32)
    # Deterministic per-dim parameters in a mild range (so the reference exp/pow stay
    # finite), mirroring the module's learnable per-dim Parameters.
    a = 0.1 * jax.random.normal(k_a, (D,), jnp.float32)
    b = 1.0 + 0.1 * jax.random.normal(k_b, (D,), jnp.float32)
    g = 0.5 * jax.random.normal(k_g, (D,), jnp.float32)
    k_par = 0.1 * jnp.abs(jax.random.normal(k_k, (D,), jnp.float32))

    z = gk_forward(u, a, b, g, k_par)
    jax.block_until_ready(z)

    z_ref = _reference_forward(u, a, b, g, k_par)
    assert z.shape == (B, D)
    np.testing.assert_allclose(np.asarray(z), np.asarray(z_ref), rtol=1e-5, atol=1e-5)

    print("KERNEL_OK")
</pallas_src>

<mosaic_0001>
module attributes {stable_mosaic.version = 11 : i64} {
  func.func @_gk_kernel(%arg0: i32, %arg1: memref<5x128xf32, #tpu.memory_space<vmem>>, %arg2: memref<8x128xf32, #tpu.memory_space<vmem>>, %arg3: memref<8x128xf32, #tpu.memory_space<vmem>>) attributes {dimension_semantics = [#tpu.dimension_semantics<parallel>], iteration_bounds = array<i64: 2>, scalar_prefetch = 0 : i64, scratch_operands = 0 : i64, tpu.core_type = #tpu.core_type<tc>, window_params = [{pipeline_mode = #tpu.pipeline_mode<synchronous>, transform_indices = @transform_0, window_bounds = array<i64: 5, 128>}, {transform_indices = @transform_1, window_bounds = array<i64: 8, 128>}, {transform_indices = @transform_2, window_bounds = array<i64: 8, 128>}]} {
    %c0 = arith.constant 0 : index
    %c0_0 = arith.constant 0 : index
    %0 = vector.load %arg1[%c0, %c0_0] : memref<5x128xf32, #tpu.memory_space<vmem>>, vector<5x128xf32>
    %1 = vector.extract_strided_slice %0 {offsets = [0, 0], sizes = [1, 128], strides = [1, 1]} : vector<5x128xf32> to vector<1x128xf32>
    %2 = vector.extract_strided_slice %0 {offsets = [1, 0], sizes = [1, 128], strides = [1, 1]} : vector<5x128xf32> to vector<1x128xf32>
    %3 = vector.extract_strided_slice %0 {offsets = [2, 0], sizes = [1, 128], strides = [1, 1]} : vector<5x128xf32> to vector<1x128xf32>
    %4 = vector.extract_strided_slice %0 {offsets = [3, 0], sizes = [1, 128], strides = [1, 1]} : vector<5x128xf32> to vector<1x128xf32>
    %5 = vector.extract_strided_slice %0 {offsets = [4, 0], sizes = [1, 128], strides = [1, 1]} : vector<5x128xf32> to vector<1x128xf32>
    %c0_1 = arith.constant 0 : index
    %c0_2 = arith.constant 0 : index
    %6 = vector.load %arg2[%c0_1, %c0_2] : memref<8x128xf32, #tpu.memory_space<vmem>>, vector<8x128xf32>
    %7 = vector.broadcast %4 : vector<1x128xf32> to vector<8x128xf32>
    %8 = arith.mulf %7, %6 : vector<8x128xf32>
    %9 = math.tanh %8 : vector<8x128xf32>
    %10 = arith.mulf %6, %6 : vector<8x128xf32>
    %11 = math.log1p %10 : vector<8x128xf32>
    %12 = vector.broadcast %5 : vector<1x128xf32> to vector<8x128xf32>
    %13 = arith.mulf %12, %11 : vector<8x128xf32>
    %14 = math.exp %13 : vector<8x128xf32>
    %15 = vector.broadcast %3 : vector<1x128xf32> to vector<8x128xf32>
    %16 = arith.mulf %15, %9 : vector<8x128xf32>
    %17 = vector.broadcast %2 : vector<1x128xf32> to vector<8x128xf32>
    %18 = arith.addf %17, %16 : vector<8x128xf32>
    %19 = arith.mulf %18, %14 : vector<8x128xf32>
    %20 = arith.mulf %19, %6 : vector<8x128xf32>
    %21 = vector.broadcast %1 : vector<1x128xf32> to vector<8x128xf32>
    %22 = arith.addf %21, %20 : vector<8x128xf32>
    %c0_3 = arith.constant 0 : index
    %c0_4 = arith.constant 0 : index
    %23 = vector.load %arg3[%c0_3, %c0_4] : memref<8x128xf32, #tpu.memory_space<vmem>>, vector<8x128xf32>
    tpu.vector_store %arg3[%c0_3, %c0_4], %22 {strides = array<i32>} : memref<8x128xf32, #tpu.memory_space<vmem>>, vector<8x128xf32>,
    return
  }
  func.func @transform_0(%arg0: i32) -> (i32, i32) {
    %c0_i32 = arith.constant 0 : i32
    %c0_i32_0 = arith.constant 0 : i32
    %c0_i32_1 = arith.constant 0 : i32
    return %c0_i32, %c0_i32_0 : i32, i32
  }
  func.func @transform_1(%arg0: i32) -> (i32, i32) {
    %c0_i32 = arith.constant 0 : i32
    %c0_i32_0 = arith.constant 0 : i32
    return %arg0, %c0_i32 : i32, i32
  }
  func.func @transform_2(%arg0: i32) -> (i32, i32) {
    %c0_i32 = arith.constant 0 : i32
    %c0_i32_0 = arith.constant 0 : i32
    return %arg0, %c0_i32 : i32, i32
  }
}

</mosaic_0001>

<llo_original>
// kernel: tpu_custom_call.1
$region0: #{tpu_custom_call.1}
  #allocation0 [shape = 'u32[]', space=smem, size = 0x4, offset = 0x4, fixed_abs, tag = 'smem constant byte address 0x4 - core index']
  #allocation1 [shape = 'u32[72,128]{1,0:T(1,128)}', space=vmem, size = 0x9000, scoped, tag = 'internal scratch']
  %s0 = inlined_call_operand.hbm [shape: f32[5,128], index: 0, kind: input, shape index: {}]
  %s1 = inlined_call_operand.hbm [shape: f32[16,128], index: 1, kind: input, shape index: {}]
  %s2 = inlined_call_operand.hbm [shape: f32[16,128], index: 2, kind: output, shape index: {}]
  %s3 = sld [smem:[#allocation0]]
  $region49: #{tpu_custom_call.1} parent=0
    _
  %s5 = ssub.s32 1, %s3
  %s6 = scalar_select 0, %s5, %s3
  $region1: #{tpu_custom_call.1} parent=0
    #allocation2 [shape = 'u8[4096]{0}', space=vmem, size = 0x1000, scoped, tag = 'input window, operand 0, single buffered']
    #allocation3 [shape = 's32[2]{0}', space=sflag, size = 0x8, scoped, tag = 'scoped memory for tpu_custom_call.1']
    #allocation4 [shape = 's32[2]{0}', space=sflag, size = 0x8, scoped, tag = 'scoped memory for tpu_custom_call.1']
    #allocation5 [shape = 'u8[8192]{0}', space=vmem, size = 0x2000, scoped, tag = 'input window, operand 1']
    #allocation6 [shape = 's32[2]{0}', space=sflag, size = 0x8, scoped, tag = 'scoped memory for tpu_custom_call.1']
    #allocation7 [shape = 'u8[8192]{0}', space=vmem, size = 0x2000, scoped, tag = 'output window, operand 0']
    %7 = vsyncpa [#allocation3], 0
    %8 = vsyncpa [#allocation6], 0
    %s9 = scalar_lea.sflag [#allocation6], 1
    %10 = vsyncpa %s9, 0
    %11 = vsyncpa [#allocation4], 0
    %s12 = scalar_lea.sflag [#allocation4], 1
    %13 = vsyncpa %s12, 0
    loop: start=0, step=1, limit=4
    $region2: #{tpu_custom_call.1} parent=1 // loop_pre_header
      _
    $region3: #{tpu_custom_call.1} parent=1 // loop_header
      %s15 = sphi 0, %s19
      %p16 = scmp.ge.s32.totalorder %s15, 4
      %s23 = sphi 0, %s23
      %s25 = sphi 0, %s23
      %s26 = sphi 0, %s25
      %s40 = sphi 0, %s26
      %s46 = sphi 0, %s48
      %s49 = sphi 0, %s46
      %s50 = sphi 0, %s49
      %s66 = sphi 0, %s50
      %s72 = sphi 0, %s74
      %s75 = sphi 0, %s72
      %s76 = sphi 0, %s75
      %s92 = sphi 0, %s76
    $region4: #{tpu_custom_call.1} parent=1 // loop_header_branch
      %18 = sbr.rel (%p16) target = $region8
    $region5: #{tpu_custom_call.1} parent=1 // loop_body
      %s20 = ssub.s32 %s15, 1
      %s21 = ssub.s32 %s15, 2
      %s22 = sadd.s32 %s15, 1
      %s24 = sadd.s32 %s23, 1
      %p27 = scmp.eq.s32.totalorder %s15, 1
      %p28 = scmp.ne.s32.totalorder %s23, %s25
      %p29 = scmp.eq.s32.totalorder %s15, 0
      %p30 = por %p28, %p29
      %p31 = scmp.ne.s32.totalorder %s23, %s25
      %p32 = scmp.eq.s32.totalorder %s20, 1
      %p33 = por %p31, %p32
      %p34 = scmp.ne.s32.totalorder %s25, %s26
      %p35 = scmp.eq.s32.totalorder %s20, 0
      %p36 = por %p34, %p35
      %p37 = scmp.ne.s32.totalorder %s25, %s26
      %p38 = scmp.eq.s32.totalorder %s21, 1
      %p39 = por %p37, %p38
      %p41 = scmp.ne.s32.totalorder %s26, %s40
      %p42 = scmp.eq.s32.totalorder %s21, 0
      %p43 = por %p41, %p42
      %s44 = ssub.s32 %s15, %s22
      %p45 = scmp.eq.s32.totalorder %s44, 0
      %s47 = sadd.s32 %s46, 1
      %s48 = scalar_select %p45, %s46, %s47
      %p51 = pneg %p45
      %p52 = scmp.eq.s32.totalorder %s15, 1
      %p53 = por %p51, %p52
      %p54 = scmp.ne.s32.totalorder %s46, %s49
      %p55 = scmp.eq.s32.totalorder %s15, 0
      %p56 = por %p54, %p55
      %p57 = scmp.ne.s32.totalorder %s46, %s49
      %p58 = scmp.eq.s32.totalorder %s20, 1
      %p59 = por %p57, %p58
      %p60 = scmp.ne.s32.totalorder %s49, %s50
      %p61 = scmp.eq.s32.totalorder %s20, 0
      %p62 = por %p60, %p61
      %p63 = scmp.ne.s32.totalorder %s49, %s50
      %p64 = scmp.eq.s32.totalorder %s21, 1
      %p65 = por %p63, %p64
      %p67 = scmp.ne.s32.totalorder %s50, %s66
      %p68 = scmp.eq.s32.totalorder %s21, 0
      %p69 = por %p67, %p68
      %s70 = ssub.s32 %s15, %s22
      %p71 = scmp.eq.s32.totalorder %s70, 0
      %s73 = sadd.s32 %s72, 1
      %s74 = scalar_select %p71, %s72, %s73
      %p77 = pneg %p71
      %p78 = scmp.eq.s32.totalorder %s15, 1
      %p79 = por %p77, %p78
      %p80 = scmp.ne.s32.totalorder %s72, %s75
      %p81 = scmp.eq.s32.totalorder %s15, 0
      %p82 = por %p80, %p81
      %p83 = scmp.ne.s32.totalorder %s72, %s75
      %p84 = scmp.eq.s32.totalorder %s20, 1
      %p85 = por %p83, %p84
      %p86 = scmp.ne.s32.totalorder %s75, %s76
      %p87 = scmp.eq.s32.totalorder %s20, 0
      %p88 = por %p86, %p87
      %p89 = scmp.ne.s32.totalorder %s75, %s76
      %p90 = scmp.eq.s32.totalorder %s21, 1
      %p91 = por %p89, %p90
      %p93 = scmp.ne.s32.totalorder %s76, %s92
      %p94 = scmp.eq.s32.totalorder %s21, 0
      %p95 = por %p93, %p94
      %p96 = scmp.le.s32.totalorder 1, %s15
      %p97 = scmp.lt.s32.totalorder %s15, 3
      %p98 = pnand %p96, %p97
      %p99 = pneg %p98
      // Predicated region
      $region9: #{tpu_custom_call.1} parent=5 // pred_check
        _
      $region10: #{tpu_custom_call.1} parent=5 // pred_check_branch
        %101 = sbr.rel (%p98) target = $region12
      $region11: #{tpu_custom_call.1} parent=5 // pred_region
        %s102 = ssub.s32 %s15, 1
        // Predicated region
        $region13: #{tpu_custom_call.1} parent=11 // pred_check
          %p103 = pneg %p36
        $region14: #{tpu_custom_call.1} parent=11 // pred_check_branch
          %105 = sbr.rel (%p103) target = $region16
        $region15: #{tpu_custom_call.1} parent=11 // pred_region
          %107 = vsyncadd [#allocation3], 0
          %s109 = sshll.u32 %s0, 4
          %s110 = int_to_ptr.hbm [resolvable:$true] %s109
          %s111 = sshll.u32 [#allocation2], 4
          %s112 = int_to_ptr.vmem [resolvable:$true] %s111
          %114 = dma.hbm_to_vmem [thread:$0]  %s110, 128, %s112, [#allocation3]
        $region16: #{tpu_custom_call.1} parent=11 // pred_fallthru
          _
      $region12: #{tpu_custom_call.1} parent=5 // pred_fallthru
        _
      %p115 = scmp.lt.s32.totalorder %s15, 2
      // Predicated region
      $region17: #{tpu_custom_call.1} parent=5 // pred_check
        %p116 = pneg %p115
      $region18: #{tpu_custom_call.1} parent=5 // pred_check_branch
        %118 = sbr.rel (%p116) target = $region20
      $region19: #{tpu_custom_call.1} parent=5 // pred_region
        // Predicated region
        $region21: #{tpu_custom_call.1} parent=19 // pred_check
          %p119 = pneg %p56
        $region22: #{tpu_custom_call.1} parent=19 // pred_check_branch
          %121 = sbr.rel (%p119) target = $region24
        $region23: #{tpu_custom_call.1} parent=19 // pred_region
          %s122 = sand.u32 %s46, 1
          %s123 = scalar_lea.sflag [#allocation6], %s122
          %s124 = sand.u32 %s46, 1
          %s125 = smul.addr %s124, 8
          %s126 = scalar_lea.vmem [#allocation5], %s125
          %128 = vsyncadd %s123, 0
          %s129 = smul.addr %s15, 8
          %s130 = scalar_lea.hbm %s1, %s129
          %s132 = sshll.u32 %s130, 4
          %s133 = int_to_ptr.hbm [resolvable:$true] %s132
          %s134 = sshll.u32 %s126, 4
          %s135 = int_to_ptr.vmem [resolvable:$true] %s134
          %137 = dma.hbm_to_vmem [thread:$0]  %s133, 128, %s135, %s123
        $region24: #{tpu_custom_call.1} parent=19 // pred_fallthru
          _
      $region20: #{tpu_custom_call.1} parent=5 // pred_fallthru
        _
      %p138 = scmp.le.s32.totalorder 1, %s15
      %p139 = scmp.lt.s32.totalorder %s15, 3
      %p140 = pnand %p138, %p139
      %p141 = pneg %p140
      // Predicated region
      $region25: #{tpu_custom_call.1} parent=5 // pred_check
        _
      $region26: #{tpu_custom_call.1} parent=5 // pred_check_branch
        %143 = sbr.rel (%p140) target = $region28
      $region27: #{tpu_custom_call.1} parent=5 // pred_region
        %s144 = ssub.s32 %s15, 1
        // Predicated region
        $region29: #{tpu_custom_call.1} parent=27 // pred_check
          %p145 = pneg %p36
        $region30: #{tpu_custom_call.1} parent=27 // pred_check_branch
          %147 = sbr.rel (%p145) target = $region32
        $region31: #{tpu_custom_call.1} parent=27 // pred_region
          %149 = dma.done [#allocation3], 128
        $region32: #{tpu_custom_call.1} parent=27 // pred_fallthru
          _
        %s150 = sand.u32 %s49, 1
        %s151 = scalar_lea.sflag [#allocation6], %s150
        %s152 = sand.u32 %s49, 1
        %s153 = smul.addr %s152, 8
        %s154 = scalar_lea.vmem [#allocation5], %s153
        // Predicated region
        $region33: #{tpu_custom_call.1} parent=27 // pred_check
          %p155 = pneg %p62
        $region34: #{tpu_custom_call.1} parent=27 // pred_check_branch
          %157 = sbr.rel (%p155) target = $region36
        $region35: #{tpu_custom_call.1} parent=27 // pred_region
          %159 = dma.done %s151, 128
        $region36: #{tpu_custom_call.1} parent=27 // pred_fallthru
          _
        %p160 = pneg %p36
        %p161 = pneg %p33
        %s162 = sand.u32 %s49, 1
        %s163 = scalar_lea.sflag [#allocation6], %s162
        %s164 = sand.u32 %s49, 1
        %s165 = smul.addr %s164, 8
        %s166 = scalar_lea.vmem [#allocation5], %s165
        %p167 = pneg %p62
        %p168 = pneg %p59
        %p169 = pneg %p88
        %p170 = pneg %p85
        %s171 = sand.u32 %s75, 1
        %s172 = scalar_lea.sflag [#allocation4], %s171
        %s173 = sand.u32 %s75, 1
        %s174 = smul.addr %s173, 8
        %s175 = scalar_lea.vmem [#allocation7], %s174
        %v176 = vld [vmem:[#allocation2] sm:$0x1f]
        %v177 = vld [vmem:[%s154] sm:$0xff]
        %v178 = vperm.slane %v176, 3
        %v179 = vmul.f32 %v178, %v177
        %v180 = vtanh.pop %v179
        %v181 = vmul.f32 %v177, %v177
        %v182 = vadd.f32 %v181, 1.0
        %v183 = vlog2.pop %v182
        %v184 = vmul.f32 %v183, 0.6931472
        %v185 = vmul.f32 -0.5, %v181
        %v186 = vadd.f32 %v185, 1.0
        %v187 = vmul.f32 %v186, %v181
        %v188 = vand.u32 2147483647, %v181
        %vm189 = vcmp.lt.f32.partialorder %v188, 0.0004427343
        %v190 = vsel %vm189, %v187, %v184
        %v191 = vperm.slane %v176, 4
        %v192 = vmul.f32 %v191, %v190
        %v193 = vmul.f32 %v192, 1.442695
        %v194 = vpow.pop %v193
        %v195 = vperm.slane %v176, 2
        %v196 = vmul.f32 %v195, %v180
        %v197 = vperm.slane %v176, 1
        %v198 = vadd.f32 %v197, %v196
        %v199 = vmul.f32 %v198, %v194
        %v200 = vmul.f32 %v199, %v177
        %v201 = vperm.slane %v176, 0
        %v202 = vadd.f32 %v201, %v200
        %203 = vst [vmem:[%s175] sm:$0xff] %v202
        %s204 = sand.u32 %s75, 1
        %s205 = scalar_lea.sflag [#allocation4], %s204
        %s206 = sand.u32 %s75, 1
        %s207 = smul.addr %s206, 8
        %s208 = scalar_lea.vmem [#allocation7], %s207
        // Predicated region
        $region37: #{tpu_custom_call.1} parent=27 // pred_check
          %p209 = pneg %p85
        $region38: #{tpu_custom_call.1} parent=27 // pred_check_branch
          %211 = sbr.rel (%p209) target = $region40
        $region39: #{tpu_custom_call.1} parent=27 // pred_region
          %213 = vsyncadd %s205, 0
          %s214 = smul.addr %s20, 8
          %s215 = scalar_lea.hbm %s2, %s214
          %s217 = sshll.u32 %s208, 4
          %s218 = int_to_ptr.vmem [resolvable:$true] %s217
          %s219 = sshll.u32 %s215, 4
          %s220 = int_to_ptr.hbm [resolvable:$true] %s219
          %222 = dma.vmem_to_hbm [thread:$0]  %s218, 128, %s220, %s205
        $region40: #{tpu_custom_call.1} parent=27 // pred_fallthru
          _
      $region28: #{tpu_custom_call.1} parent=5 // pred_fallthru
        _
      %p223 = scmp.le.s32.totalorder 2, %s15
      // Predicated region
      $region41: #{tpu_custom_call.1} parent=5 // pred_check
        %p224 = pneg %p223
      $region42: #{tpu_custom_call.1} parent=5 // pred_check_branch
        %226 = sbr.rel (%p224) target = $region44
      $region43: #{tpu_custom_call.1} parent=5 // pred_region
        %s227 = ssub.s32 %s15, 2
        // Predicated region
        $region45: #{tpu_custom_call.1} parent=43 // pred_check
          %p228 = pneg %p91
        $region46: #{tpu_custom_call.1} parent=43 // pred_check_branch
          %230 = sbr.rel (%p228) target = $region48
        $region47: #{tpu_custom_call.1} parent=43 // pred_region
          %s231 = sand.u32 %s76, 1
          %s232 = scalar_lea.sflag [#allocation4], %s231
          %s233 = sand.u32 %s76, 1
          %s234 = smul.addr %s233, 8
          %s235 = scalar_lea.vmem [#allocation7], %s234
          %237 = dma.done %s232, 128
        $region48: #{tpu_custom_call.1} parent=43 // pred_fallthru
          _
      $region44: #{tpu_custom_call.1} parent=5 // pred_fallthru
        _
    $region6: #{tpu_custom_call.1} parent=1 // loop_footer
      %s19 = sadd.s32 1, %s15
    $region7: #{tpu_custom_call.1} parent=1 // loop_footer_branch
      %14 = sbr.rel target = $region3
    $region8: #{tpu_custom_call.1} parent=1 // loop_exit
      _
    %238 = vsyncpa [#allocation3], 1
    %s239 = scalar_lea.sflag [#allocation3], 1
    %240 = vsyncpa %s239, 1
    %241 = vsyncpa [#allocation6], 1
    %s242 = scalar_lea.sflag [#allocation6], 1
    %243 = vsyncpa %s242, 1
    %244 = vsyncpa [#allocation4], 1
    %s245 = scalar_lea.sflag [#allocation4], 1
    %246 = vsyncpa %s245, 1

</llo_original>
